<compile_context>
chip_gen: v7x
topology: tpu7x:2x2x1
jax: 0.10.0
libtpu: 0.0.40
codegen_flags: <defaults>
</compile_context>

<pallas_src>
import functools
from typing import NamedTuple

import jax
import jax.numpy as jnp
from jax.experimental import pallas as pl
from jax.experimental.pallas import tpu as pltpu


def _round_up(x, m):
    return (x + m - 1) // m * m


def _cdiv(a, b):
    return (a + b - 1) // b


# ----------------------------------------------------------------------------
# Kernels
# ----------------------------------------------------------------------------
def _gen_layer_kernel_fused(x_ref, w_ref, b_ref, o_ref, acc_ref):
    """grid = (dout_tiles, n_tiles, k_tiles); fused [tn, t_dout] output."""
    k = pl.program_id(2)

    @pl.when(k == 0)
    def _init():
        acc_ref[...] = jnp.zeros_like(acc_ref)

    acc_ref[...] += jnp.dot(
        x_ref[...], w_ref[...], preferred_element_type=jnp.float32
    )

    @pl.when(k == pl.num_programs(2) - 1)
    def _finalize():
        o_ref[...] = (acc_ref[...] + b_ref[...]).astype(o_ref.dtype)


def _gen_layer_kernel_split(x_ref, w_ref, b_ref, lo_ref, bo_ref, acc_ref, *,
                            layer_dim):
    """Same as fused, but emits the two module outputs directly.

    Only used when layer_dim and bias_dim are multiples of 128, so both slices
    below are static, 128-lane-aligned -> lane-dense unmasked stores.
    """
    k = pl.program_id(2)

    @pl.when(k == 0)
    def _init():
        acc_ref[...] = jnp.zeros_like(acc_ref)

    acc_ref[...] += jnp.dot(
        x_ref[...], w_ref[...], preferred_element_type=jnp.float32
    )

    @pl.when(k == pl.num_programs(2) - 1)
    def _finalize():
        y = acc_ref[...] + b_ref[...]
        lo_ref[...] = y[:, :layer_dim].astype(lo_ref.dtype)
        bo_ref[...] = y[:, layer_dim:].astype(bo_ref.dtype)


# ----------------------------------------------------------------------------
# One-time parameter prep (hoisted out of the per-call forward path)
# ----------------------------------------------------------------------------
class GenLayerParams(NamedTuple):
    w_t: jax.Array      # [d_in_p, d_out_p] pre-transposed, padded, compute dtype
    bias_p: jax.Array   # [1, d_out_p] float32
    layer_dim: int
    d_out: int          # unpadded layer_dim + bias_dim
    d_in: int           # unpadded input_dim
    tk: int             # contraction tile (== d_in_p when untiled)
    t_dout: int         # output-column tile (== d_out_p when untiled)
    split_outputs: bool


def prepare_gen_layer_params(weight, bias, layer_dim, *,
                             compute_dtype=jnp.bfloat16,
                             dout_tile_max=1024,
                             kin_tile=1024,
                             kin_tile_threshold=4096):
    """Run ONCE at init: transpose / pad / cast the nn.Linear parameters.

    weight: [layer_dim + bias_dim, input_dim]  (PyTorch nn.Linear layout)
    bias:   [layer_dim + bias_dim]
    """
    d_out, d_in = weight.shape
    assert bias.shape == (d_out,), bias.shape
    bias_dim = d_out - layer_dim
    assert 0 <= layer_dim <= d_out

    # Output-column layout.
    split_outputs = (
        layer_dim % 128 == 0 and bias_dim % 128 == 0
        and layer_dim > 0 and bias_dim > 0
        and d_out <= dout_tile_max
    )
    if split_outputs:
        d_out_p = d_out          # already lane aligned, no padding needed
        t_dout = d_out
    else:
        d_out_p = _round_up(d_out, 256)          # full MXU pass on v6e/v7x
        if d_out_p <= dout_tile_max:
            t_dout = d_out_p
        else:
            t_dout = dout_tile_max
            d_out_p = _round_up(d_out_p, t_dout)

    # Contraction tiling: resident for small/medium d_in, K-tiled above that.
    if d_in > kin_tile_threshold:
        tk = kin_tile
        d_in_p = _round_up(d_in, tk)
    else:
        tk = d_in
        d_in_p = d_in

    # Pre-transpose once: F.linear y = x @ W.T + b  ->  y = x @ w_t + b.
    w_t = jnp.asarray(weight).T.astype(compute_dtype)        # [d_in, d_out]
    if d_in_p != d_in or d_out_p != d_out:
        w_t = jnp.pad(w_t, ((0, d_in_p - d_in), (0, d_out_p - d_out)))

    bias_p = jnp.asarray(bias).astype(jnp.float32)
    if d_out_p != d_out:
        bias_p = jnp.pad(bias_p, (0, d_out_p - d_out))
    bias_p = bias_p.reshape(1, d_out_p)

    return GenLayerParams(w_t=w_t, bias_p=bias_p, layer_dim=int(layer_dim),
                          d_out=int(d_out), d_in=int(d_in), tk=int(tk),
                          t_dout=int(t_dout), split_outputs=bool(split_outputs))


# ----------------------------------------------------------------------------
# Forward
# ----------------------------------------------------------------------------
def gen_layer_forward(x, params: GenLayerParams, *, tile_n=512):
    """Pallas implementation of GenLayer.forward.

    x: [N, input_dim]  ->  (layer_out [N, layer_dim], bias_out [N, bias_dim])
    """
    N, d_in = x.shape
    assert d_in == params.d_in, (d_in, params.d_in)
    d_in_p, d_out_p = params.w_t.shape
    tk, t_dout = params.tk, params.t_dout
    layer_dim, d_out = params.layer_dim, params.d_out
    bias_dim = d_out - layer_dim
    compute_dtype = params.w_t.dtype
    out_dtype = x.dtype

    # --- balanced row tiling (16-row sublane multiple for bf16 packing) -----
    itemsize_c = jnp.dtype(compute_dtype).itemsize
    sub = 16 if itemsize_c < 4 else 8
    n_row_tiles = _cdiv(N, tile_n)
    tn = _round_up(_cdiv(N, n_row_tiles), sub)
    n_p = _round_up(N, tn)

    x_c = x.astype(compute_dtype)
    if n_p != N or d_in_p != d_in:
        x_c = jnp.pad(x_c, ((0, n_p - N), (0, d_in_p - d_in)))

    n_tiles = n_p // tn
    dout_tiles = d_out_p // t_dout
    k_tiles = d_in_p // tk
    # d_out axis OUTERMOST (megacore shards weight columns on v7x), rows in the
    # middle, reduction axis LAST and marked "arbitrary".
    grid = (dout_tiles, n_tiles, k_tiles)

    # Weight / bias never change block index when fully resident -> single
    # buffer them (halves their VMEM footprint, no lost overlap).
    resident_wb = (dout_tiles == 1 and k_tiles == 1)
    wb_kwargs = dict(pipeline_mode=pl.Buffered(1)) if resident_wb else {}

    x_spec = pl.BlockSpec((tn, tk), lambda j, i, k: (i, k))
    w_spec = pl.BlockSpec((tk, t_dout), lambda j, i, k: (k, j), **wb_kwargs)
    b_spec = pl.BlockSpec((1, t_dout), lambda j, i, k: (0, j), **wb_kwargs)

    # --- explicit VMEM budget ------------------------------------------------
    itemsize_o = jnp.dtype(out_dtype).itemsize
    x_blk = tn * tk * itemsize_c
    w_blk = tk * t_dout * itemsize_c
    b_blk = t_dout * 4
    o_blk = tn * t_dout * itemsize_o
    acc_blk = tn * t_dout * 4
    wb_bufs = 1 if resident_wb else 2
    vmem_need = 2 * x_blk + wb_bufs * (w_blk + b_blk) + 2 * o_blk + acc_blk
    # +25% headroom, >=32 MiB, capped so we stay inside v7x's 64 MiB physical.
    vmem_limit = int(min(max(vmem_need * 1.25, 32 * 1024 * 1024),
                         56 * 1024 * 1024))

    # --- cost estimate (accounts for tiling-induced re-streaming) -----------
    x_streams = dout_tiles                      # x re-fetched per column tile
    w_streams = n_tiles if k_tiles > 1 else 1   # weight re-fetched per row tile
    cost = pl.CostEstimate(
        flops=2 * N * d_in * d_out,
        transcendentals=0,
        bytes_accessed=int(
            x_c.size * itemsize_c * x_streams
            + params.w_t.size * itemsize_c * w_streams
            + params.bias_p.size * 4
            + n_p * d_out_p * itemsize_o
        ),
    )

    compiler_params = pltpu.CompilerParams(
        dimension_semantics=("parallel", "parallel", "arbitrary"),
        vmem_limit_bytes=vmem_limit,
    )

    if params.split_outputs:
        kernel = functools.partial(_gen_layer_kernel_split, layer_dim=layer_dim)
        out_shape = (jax.ShapeDtypeStruct((n_p, layer_dim), out_dtype),
                     jax.ShapeDtypeStruct((n_p, bias_dim), out_dtype))
        out_specs = [pl.BlockSpec((tn, layer_dim), lambda j, i, k: (i, 0)),
                     pl.BlockSpec((tn, bias_dim), lambda j, i, k: (i, 0))]
    else:
        kernel = _gen_layer_kernel_fused
        out_shape = jax.ShapeDtypeStruct((n_p, d_out_p), out_dtype)
        out_specs = pl.BlockSpec((tn, t_dout), lambda j, i, k: (i, j))

    outs = pl.pallas_call(
        kernel,
        out_shape=out_shape,
        grid_spec=pltpu.PrefetchScalarGridSpec(
            num_scalar_prefetch=0,
            grid=grid,
            in_specs=[x_spec, w_spec, b_spec],
            out_specs=out_specs,
            scratch_shapes=[pltpu.VMEM((tn, t_dout), jnp.float32)],
        ),
        compiler_params=compiler_params,
        cost_estimate=cost,
    )(x_c, params.w_t, params.bias_p)

    if params.split_outputs:
        layer_out, bias_out = outs
        if n_p != N:
            layer_out = layer_out[:N]
            bias_out = bias_out[:N]
        return layer_out, bias_out
    else:
        # Split point not 128-lane aligned: slice in the wrapper (in-kernel
        # unaligned lane splits would force masked vst.msk stores).
        y = outs[:N, :d_out]
        return y[:, :layer_dim], y[:, layer_dim:]


def gen_layer_forward_ref(x, weight, bias, layer_dim):
    """Pure-JAX (f32) reference mirroring the PyTorch module."""
    y = x @ weight.T + bias
    return y[:, :layer_dim], y[:, layer_dim:]


# ----------------------------------------------------------------------------
# Self-test
# ----------------------------------------------------------------------------
if __name__ == "__main__":
    key = jax.random.PRNGKey(0)
    k_x, k_w, k_b, k_x2, k_w2, k_b2 = jax.random.split(key, 6)

    # Case 1: module-scale shapes — Linear(32, 48), N=8 rows, layer_dim=32,
    # bias_dim=16 (unaligned split -> fused output + wrapper slice path).
    N, input_dim, layer_dim, bias_dim = 8, 32, 32, 16
    d_out = layer_dim + bias_dim
    x = jax.random.normal(k_x, (N, input_dim), dtype=jnp.float32)
    weight = jax.random.normal(k_w, (d_out, input_dim), dtype=jnp.float32) * 0.1
    bias = jax.random.normal(k_b, (d_out,), dtype=jnp.float32) * 0.1

    params = prepare_gen_layer_params(weight, bias, layer_dim)  # one-time prep
    layer_out, bias_out = gen_layer_forward(x, params)
    layer_out, bias_out = jax.block_until_ready((layer_out, bias_out))

    ref_layer, ref_bias = gen_layer_forward_ref(x, weight, bias, layer_dim)
    assert layer_out.shape == (N, layer_dim), layer_out.shape
    assert bias_out.shape == (N, bias_dim), bias_out.shape
    # bf16 operands, f32 accumulation -> widened tolerances vs f32 reference.
    assert jnp.allclose(layer_out, ref_layer, atol=5e-2, rtol=5e-2), "layer_out mismatch"
    assert jnp.allclose(bias_out, ref_bias, atol=5e-2, rtol=5e-2), "bias_out mismatch"

    # Case 2: 128-aligned split -> two lane-dense outputs straight from the
    # kernel (no post-call slice copies); also exercises row padding (N=40).
    N2, input_dim2, layer_dim2, bias_dim2 = 40, 128, 128, 128
    d_out2 = layer_dim2 + bias_dim2
    x2 = jax.random.normal(k_x2, (N2, input_dim2), dtype=jnp.float32)
    weight2 = jax.random.normal(k_w2, (d_out2, input_dim2), dtype=jnp.float32) * 0.1
    bias2 = jax.random.normal(k_b2, (d_out2,), dtype=jnp.float32) * 0.1

    params2 = prepare_gen_layer_params(weight2, bias2, layer_dim2)
    assert params2.split_outputs
    lo2, bo2 = gen_layer_forward(x2, params2)
    lo2, bo2 = jax.block_until_ready((lo2, bo2))

    rl2, rb2 = gen_layer_forward_ref(x2, weight2, bias2, layer_dim2)
    assert lo2.shape == (N2, layer_dim2), lo2.shape
    assert bo2.shape == (N2, bias_dim2), bo2.shape
    assert jnp.allclose(lo2, rl2, atol=5e-2, rtol=5e-2), "layer_out (case 2) mismatch"
    assert jnp.allclose(bo2, rb2, atol=5e-2, rtol=5e-2), "bias_out (case 2) mismatch"

    print("KERNEL_OK")
</pallas_src>

<mosaic_0001>
module attributes {stable_mosaic.version = 11 : i64} {
  func.func @_gen_layer_kernel_fused(%arg0: i32, %arg1: i32, %arg2: i32, %arg3: memref<16x32xbf16, #tpu.memory_space<vmem>>, %arg4: memref<32x256xbf16, #tpu.memory_space<vmem>>, %arg5: memref<1x256xf32, #tpu.memory_space<vmem>>, %arg6: memref<16x256xf32, #tpu.memory_space<vmem>>, %arg7: memref<16x256xf32, #tpu.memory_space<vmem>>) attributes {dimension_semantics = [#tpu.dimension_semantics<parallel>, #tpu.dimension_semantics<parallel>, #tpu.dimension_semantics<arbitrary>], iteration_bounds = array<i64: 1, 1, 1>, scalar_prefetch = 0 : i64, scratch_operands = 1 : i64, tpu.core_type = #tpu.core_type<tc>, window_params = [{transform_indices = @transform_0, window_bounds = array<i64: 16, 32>}, {pipeline_mode = #tpu.pipeline_mode<synchronous>, transform_indices = @transform_1, window_bounds = array<i64: 32, 256>}, {pipeline_mode = #tpu.pipeline_mode<synchronous>, transform_indices = @transform_2, window_bounds = array<i64: 1, 256>}, {transform_indices = @transform_3, window_bounds = array<i64: 16, 256>}]} {
    %c0_i32 = arith.constant 0 : i32
    %0 = arith.cmpi eq, %arg2, %c0_i32 : i32
    %1 = arith.extui %0 : i1 to i32
    %c0_i32_0 = arith.constant 0 : i32
    %2 = arith.cmpi ne, %1, %c0_i32_0 : i32
    scf.if %2 {
      %cst_10 = arith.constant 0.000000e+00 : f32
      %12 = vector.broadcast %cst_10 : f32 to vector<16x256xf32>
      %c0_11 = arith.constant 0 : index
      %c0_12 = arith.constant 0 : index
      %13 = vector.load %arg7[%c0_11, %c0_12] : memref<16x256xf32, #tpu.memory_space<vmem>>, vector<16x256xf32>
      tpu.vector_store %arg7[%c0_11, %c0_12], %12 {strides = array<i32>} : memref<16x256xf32, #tpu.memory_space<vmem>>, vector<16x256xf32>,
    } else {
    }
    %c0 = arith.constant 0 : index
    %c0_1 = arith.constant 0 : index
    %3 = vector.load %arg7[%c0, %c0_1] : memref<16x256xf32, #tpu.memory_space<vmem>>, vector<16x256xf32>
    %c0_2 = arith.constant 0 : index
    %c0_3 = arith.constant 0 : index
    %4 = vector.load %arg3[%c0_2, %c0_3] : memref<16x32xbf16, #tpu.memory_space<vmem>>, vector<16x32xbf16>
    %c0_4 = arith.constant 0 : index
    %c0_5 = arith.constant 0 : index
    %5 = vector.load %arg4[%c0_4, %c0_5] : memref<32x256xbf16, #tpu.memory_space<vmem>>, vector<32x256xbf16>
    %cst = arith.constant dense<0.000000e+00> : vector<16x256xf32>
    %6 = tpu.matmul %4, %5, %cst {dimension_numbers = #tpu.dot_dimension_numbers<[1], [0], [0], [1], [0, 0, 1, 1], [], []>} : vector<16x32xbf16>, vector<32x256xbf16>, vector<16x256xf32> -> vector<16x256xf32>
    %7 = arith.addf %3, %6 : vector<16x256xf32>
    %c0_6 = arith.constant 0 : index
    %c0_7 = arith.constant 0 : index
    %8 = vector.load %arg7[%c0_6, %c0_7] : memref<16x256xf32, #tpu.memory_space<vmem>>, vector<16x256xf32>
    tpu.vector_store %arg7[%c0_6, %c0_7], %7 {strides = array<i32>} : memref<16x256xf32, #tpu.memory_space<vmem>>, vector<16x256xf32>,
    %c0_i32_8 = arith.constant 0 : i32
    %9 = arith.cmpi eq, %arg2, %c0_i32_8 : i32
    %10 = arith.extui %9 : i1 to i32
    %c0_i32_9 = arith.constant 0 : i32
    %11 = arith.cmpi ne, %10, %c0_i32_9 : i32
    scf.if %11 {
      %c0_10 = arith.constant 0 : index
      %c0_11 = arith.constant 0 : index
      %12 = vector.load %arg7[%c0_10, %c0_11] : memref<16x256xf32, #tpu.memory_space<vmem>>, vector<16x256xf32>
      %c0_12 = arith.constant 0 : index
      %c0_13 = arith.constant 0 : index
      %13 = vector.load %arg5[%c0_12, %c0_13] : memref<1x256xf32, #tpu.memory_space<vmem>>, vector<1x256xf32>
      %14 = vector.broadcast %13 : vector<1x256xf32> to vector<16x256xf32>
      %15 = arith.addf %12, %14 : vector<16x256xf32>
      %c0_14 = arith.constant 0 : index
      %c0_15 = arith.constant 0 : index
      %16 = vector.load %arg6[%c0_14, %c0_15] : memref<16x256xf32, #tpu.memory_space<vmem>>, vector<16x256xf32>
      tpu.vector_store %arg6[%c0_14, %c0_15], %15 {strides = array<i32>} : memref<16x256xf32, #tpu.memory_space<vmem>>, vector<16x256xf32>,
    } else {
    }
    return
  }
  func.func @transform_0(%arg0: i32, %arg1: i32, %arg2: i32) -> (i32, i32) {
    %c0_i32 = arith.constant 0 : i32
    return %arg1, %arg2 : i32, i32
  }
  func.func @transform_1(%arg0: i32, %arg1: i32, %arg2: i32) -> (i32, i32) {
    %c0_i32 = arith.constant 0 : i32
    return %arg2, %arg0 : i32, i32
  }
  func.func @transform_2(%arg0: i32, %arg1: i32, %arg2: i32) -> (i32, i32) {
    %c0_i32 = arith.constant 0 : i32
    %c0_i32_0 = arith.constant 0 : i32
    return %c0_i32, %arg0 : i32, i32
  }
  func.func @transform_3(%arg0: i32, %arg1: i32, %arg2: i32) -> (i32, i32) {
    %c0_i32 = arith.constant 0 : i32
    return %arg1, %arg0 : i32, i32
  }
}

</mosaic_0001>

<llo_original>
// kernel: tpu_custom_call.1
$region0: #{tpu_custom_call.1}
  #allocation0 [shape = 'u32[]', space=smem, size = 0x4, offset = 0x4, fixed_abs, tag = 'smem constant byte address 0x4 - core index']
  #allocation1 [shape = 'u32[144,128]{1,0:T(1,128)}', space=vmem, size = 0x12000, scoped, tag = 'internal scratch']
  #allocation2 [shape = 'f32[16,256]{1,0:T(8,128)}', space=vmem, size = 0x4000, scoped, tag = 'scratch operand']
  %s0 = inlined_call_operand.hbm [shape: bf16[16,32], index: 0, kind: input, shape index: {}]
  %s1 = inlined_call_operand.hbm [shape: bf16[32,256], index: 1, kind: input, shape index: {}]
  %s2 = inlined_call_operand.vmem [shape: f32[1,256], index: 2, kind: input, shape index: {}]
  %s3 = inlined_call_operand.hbm [shape: f32[16,256], index: 3, kind: output, shape index: {}]
  %s4 = sld [smem:[#allocation0]]
  $region38: #{tpu_custom_call.1} parent=0
    _
  %s6 = ssub.s32 1, %s4
  %s7 = scalar_select 0, %s6, %s4
  $region1: #{tpu_custom_call.1} parent=0
    #allocation3 [shape = 'u8[4096]{0}', space=vmem, size = 0x1000, scoped, tag = 'input window, operand 0, single buffered']
    #allocation4 [shape = 's32[1]{0}', space=sflag, size = 0x4, scoped, tag = 'scoped memory for tpu_custom_call.1']
    #allocation5 [shape = 's32[1]{0}', space=sflag, size = 0x4, scoped, tag = 'scoped memory for tpu_custom_call.1']
    #allocation6 [shape = 'u8[16384]{0}', space=vmem, size = 0x4000, scoped, tag = 'input window, operand 1, single buffered']
    #allocation7 [shape = 's32[1]{0}', space=sflag, size = 0x4, scoped, tag = 'scoped memory for tpu_custom_call.1']
    #allocation8 [shape = 'u8[16384]{0}', space=vmem, size = 0x4000, scoped, tag = 'output window, operand 0, single buffered']
    %8 = vsyncpa [#allocation4], 0
    %9 = vsyncpa [#allocation7], 0
    %10 = vsyncpa [#allocation5], 0
    // Predicated region
    $region2: #{tpu_custom_call.1} parent=1 // pred_check
      _
    $region3: #{tpu_custom_call.1} parent=1 // pred_check_branch
      %12 = sbr.rel (0) target = $region5
    $region4: #{tpu_custom_call.1} parent=1 // pred_region
      %s14 = ssub.s32 128, 128
      %15 = vsyncadd [#allocation4], %s14
      %s16 = sshll.u32 [#allocation3], 4
      %s17 = int_to_ptr.vmem [resolvable:$true] %s16
      %22 = dma.hbm_to_vmem [thread:$0]  %s0, 128, %s17, [#allocation4], 64, 64, 4
    $region5: #{tpu_custom_call.1} parent=1 // pred_fallthru
      _
    // Predicated region
    $region6: #{tpu_custom_call.1} parent=1 // pred_check
      _
    $region7: #{tpu_custom_call.1} parent=1 // pred_check_branch
      %24 = sbr.rel (0) target = $region9
    $region8: #{tpu_custom_call.1} parent=1 // pred_region
      %s26 = ssub.s32 512, 512
      %27 = vsyncadd [#allocation7], %s26
      %s28 = sshll.u32 [#allocation6], 4
      %s29 = int_to_ptr.vmem [resolvable:$true] %s28
      %34 = dma.hbm_to_vmem [thread:$0]  %s1, 512, %s29, [#allocation7], 128, 128, 8
    $region9: #{tpu_custom_call.1} parent=1 // pred_fallthru
      _
    // Predicated region
    $region10: #{tpu_custom_call.1} parent=1 // pred_check
      _
    $region11: #{tpu_custom_call.1} parent=1 // pred_check_branch
      %36 = sbr.rel (0) target = $region13
    $region12: #{tpu_custom_call.1} parent=1 // pred_region
      _
    $region13: #{tpu_custom_call.1} parent=1 // pred_fallthru
      _
    // Predicated region
    $region14: #{tpu_custom_call.1} parent=1 // pred_check
      _
    $region15: #{tpu_custom_call.1} parent=1 // pred_check_branch
      %38 = sbr.rel (0) target = $region17
    $region16: #{tpu_custom_call.1} parent=1 // pred_region
      %39 = dma.done [#allocation4], 128
    $region17: #{tpu_custom_call.1} parent=1 // pred_fallthru
      _
    // Predicated region
    $region18: #{tpu_custom_call.1} parent=1 // pred_check
      _
    $region19: #{tpu_custom_call.1} parent=1 // pred_check_branch
      %41 = sbr.rel (0) target = $region21
    $region20: #{tpu_custom_call.1} parent=1 // pred_region
      %42 = dma.done [#allocation7], 512
    $region21: #{tpu_custom_call.1} parent=1 // pred_fallthru
      _
    %p44 = scmp.eq.s32.totalorder 0, 0
    // Predicated region
    $region22: #{tpu_custom_call.1} parent=1 // pred_check
      %p45 = pneg %p44
    $region23: #{tpu_custom_call.1} parent=1 // pred_check_branch
      %47 = sbr.rel (%p45) target = $region25
    $region24: #{tpu_custom_call.1} parent=1 // pred_region
      %48 = vst [vmem:[#allocation2] sm:$0xff] 0.0
      %49 = vst [vmem:[#allocation2 + $0x8] sm:$0xff] 0.0
      %50 = vst [vmem:[#allocation2 + $0x10] sm:$0xff] 0.0
      %51 = vst [vmem:[#allocation2 + $0x18] sm:$0xff] 0.0
    $region25: #{tpu_custom_call.1} parent=1 // pred_fallthru
      _
    %v52 = vld [vmem:[#allocation2] sm:$0xff]
    %v53 = vld [vmem:[#allocation2 + $0x8] sm:$0xff]
    %v54 = vld [vmem:[#allocation2 + $0x10] sm:$0xff]
    %v55 = vld [vmem:[#allocation2 + $0x18] sm:$0xff]
    %v56 = vld [vmem:[#allocation3] sm:$0xf]
    %v57 = vld [vmem:[#allocation3 + $0x4] sm:$0xf]
    %v58 = vld [vmem:[#allocation6] sm:$0xff]
    %v59 = vld [vmem:[#allocation6 + $0x8] sm:$0xff]
    %v60 = vld [vmem:[#allocation6 + $0x10] sm:$0xff]
    %v61 = vld [vmem:[#allocation6 + $0x18] sm:$0xff]
    %v64 = vunpack.c.l.b16 %v56
    %v65 = vunpack.c.l.b16 %v57
    %v66 = vpack.c.b16 %v65, %v64
    %v71 = vunpack.c.l.b16 %v58
    %v72 = vunpack.c.h.b16 %v58
    %v73 = vunpack.c.l.b16 %v59
    %v74 = vunpack.c.h.b16 %v59
    %v75 = vunpack.c.l.b16 %v60
    %v76 = vunpack.c.h.b16 %v60
    %v77 = vunpack.c.l.b16 %v61
    %v78 = vunpack.c.h.b16 %v61
    %v79 = vpack.c.b16 %v73, %v71
    %v80 = vpack.c.b16 %v74, %v72
    %v81 = vpack.c.b16 %v77, %v75
    %v82 = vpack.c.b16 %v78, %v76
    %vm87 = vcmask 261120
    %v89 = vsel %vm87, %v66, 0
    %91 = vmatprep.subr.bf16.mxu0 %v80
    %92 = vmatpush1.bf16.msra.mxu0 %v79
    %93 = vmatprep.subr.bf16.mxu0 %v82
    %94 = vmatpush1.bf16.msra.mxu0 %v81
    %95 = vmatprep.subr.bf16.mxu0 0
    %96 = vmatpush1.bf16.msra.mxu0 0
    %97 = vmatprep.subr.bf16.mxu0 0
    %98 = vmatpush1.bf16.msra.mxu0 0
    %99 = vmatprep.subr.bf16.mxu0 0
    %100 = vmatpush1.bf16.msra.mxu0 0
    %101 = vmatprep.subr.bf16.mxu0 0
    %102 = vmatpush1.bf16.msra.mxu0 0
    %103 = vmatprep.subr.bf16.mxu0 0
    %104 = vmatpush1.bf16.msra.mxu0 0
    %105 = vmatprep.subr.bf16.mxu0 0
    %106 = vmatpush1.bf16.msra.mxu0 0
    %107 = vmatprep.subr.bf16.mxu0 0
    %108 = vmatpush1.bf16.msra.mxu0 0
    %109 = vmatprep.subr.bf16.mxu0 0
    %110 = vmatpush1.bf16.msra.mxu0 0
    %111 = vmatprep.subr.bf16.mxu0 0
    %112 = vmatpush1.bf16.msra.mxu0 0
    %113 = vmatprep.subr.bf16.mxu0 0
    %114 = vmatpush1.bf16.msra.mxu0 0
    %115 = vmatprep.subr.bf16.mxu0 0
    %116 = vmatpush1.bf16.msra.mxu0 0
    %117 = vmatprep.subr.bf16.mxu0 0
    %118 = vmatpush1.bf16.msra.mxu0 0
    %119 = vmatprep.subr.bf16.mxu0 0
    %120 = vmatpush1.bf16.msra.mxu0 0
    %121 = vmatprep.subr.bf16.mxu0 0
    %122 = vmatpush1.bf16.msra.mxu0 0
    %123 = vmatprep.mubr.bf16.mxu0 0
    %124 = vmatmul.mubr.bf16.gmra.mrb[0].mxu0 %v89
    %v125 = vpop.f32.mrb[0].mxu0
    %v126 = vadd.f32 0.0, %v125
    %v127 = vpop.f32.mrb[0].mxu0
    %v128 = vadd.f32 0.0, %v127
    %v129 = vpop.f32.mrb[0].mxu0
    %v130 = vadd.f32 0.0, %v129
    %v131 = vpop.f32.mrb[0].mxu0
    %v132 = vadd.f32 0.0, %v131
    %133 = vdwg.mxu0
    %v134 = vadd.f32 %v52, %v126
    %v135 = vadd.f32 %v53, %v128
    %v136 = vadd.f32 %v54, %v130
    %v137 = vadd.f32 %v55, %v132
    %138 = vst [vmem:[#allocation2] sm:$0xff] %v134
    %139 = vst [vmem:[#allocation2 + $0x8] sm:$0xff] %v135
    %140 = vst [vmem:[#allocation2 + $0x10] sm:$0xff] %v136
    %141 = vst [vmem:[#allocation2 + $0x18] sm:$0xff] %v137
    // Predicated region
    $region26: #{tpu_custom_call.1} parent=1 // pred_check
      %p142 = pneg %p44
    $region27: #{tpu_custom_call.1} parent=1 // pred_check_branch
      %144 = sbr.rel (%p142) target = $region29
    $region28: #{tpu_custom_call.1} parent=1 // pred_region
      %v145 = vld [vmem:[#allocation2] sm:$0xff]
      %v146 = vld [vmem:[#allocation2 + $0x8] sm:$0xff]
      %v147 = vld [vmem:[#allocation2 + $0x10] sm:$0xff]
      %v148 = vld [vmem:[#allocation2 + $0x18] sm:$0xff]
      %v149 = vld [vmem:[%s2] sm:$0x3]
      %v151 = vlaneseq
      %v152 = vshrl.u32 %v151, 7
      %v153 = vsub.s32 0, %v152
      %v154 = vrot.slane %v149, %v153
      %v155 = vlaneseq
      %v156 = vshrl.u32 %v155, 7
      %v157 = vsub.s32 1, %v156
      %v158 = vrot.slane %v149, %v157
      %v161 = vadd.f32 %v145, %v154
      %v162 = vadd.f32 %v146, %v158
      %v163 = vadd.f32 %v147, %v154
      %v164 = vadd.f32 %v148, %v158
      %165 = vst [vmem:[#allocation8] sm:$0xff] %v161
      %166 = vst [vmem:[#allocation8 + $0x8] sm:$0xff] %v162
      %167 = vst [vmem:[#allocation8 + $0x10] sm:$0xff] %v163
      %168 = vst [vmem:[#allocation8 + $0x18] sm:$0xff] %v164
    $region29: #{tpu_custom_call.1} parent=1 // pred_fallthru
      _
    // Predicated region
    $region30: #{tpu_custom_call.1} parent=1 // pred_check
      _
    $region31: #{tpu_custom_call.1} parent=1 // pred_check_branch
      %170 = sbr.rel (0) target = $region33
    $region32: #{tpu_custom_call.1} parent=1 // pred_region
      %s172 = ssub.s32 512, 512
      %173 = vsyncadd [#allocation5], %s172
      %s174 = sshll.u32 [#allocation8], 4
      %s175 = int_to_ptr.vmem [resolvable:$true] %s174
      %180 = dma.vmem_to_hbm [thread:$0]  %s175, 512, %s3, [#allocation5], 256, 256, 16
    $region33: #{tpu_custom_call.1} parent=1 // pred_fallthru
      _
    // Predicated region
    $region34: #{tpu_custom_call.1} parent=1 // pred_check
      _
    $region35: #{tpu_custom_call.1} parent=1 // pred_check_branch
      %182 = sbr.rel (0) target = $region37
    $region36: #{tpu_custom_call.1} parent=1 // pred_region
      %183 = dma.done [#allocation5], 512
    $region37: #{tpu_custom_call.1} parent=1 // pred_fallthru
      _
    %184 = vsyncpa [#allocation4], 1
    %185 = vsyncpa [#allocation7], 1
    %186 = vsyncpa [#allocation5], 1

</llo_original>
